<compile_context>
chip_gen: v7x
topology: tpu7x:2x2x1
jax: 0.10.0
libtpu: 0.0.40
codegen_flags: <defaults>
</compile_context>

<pallas_src>
import functools

import jax
import jax.numpy as jnp
from jax import lax
from jax.experimental import pallas as pl
from jax.experimental.pallas import tpu as pltpu


def _activ(x):
    # 2 * (sigmoid(x) - 0.5)
    return 2.0 * (jax.nn.sigmoid(x) - 0.5)


def _addstcn_kernel(x_ref, pack_ref, s_ref, effb_ref, out_ref,
                    *, num_levels, kernel_size, dilation_c):
    h = x_ref[...].astype(jnp.float32)          # (R, T) = (nb*C, T_pad)
    R, T = h.shape
    K = kernel_size

    # (1, T) time index; per-tap {0,1} masks are built lazily right before
    # their single use (only one live at a time, broadcast over sublanes)
    # instead of L hoisted (R, T) f32 masks living across the unrolled loop.
    t_row = lax.broadcasted_iota(jnp.int32, (1, T), 1)

    def causal_depthwise_conv(z, w, b, d):
        # out[r, t] = b[r] + sum_k w[r, k] * z[r, t - (K-1-k)*d]   (0 for t<0)
        acc = b + w[:, K - 1:K] * z             # k = K-1 -> shift 0
        for k in range(K - 1):                  # K small & static -> unrolled
            s = (K - 1 - k) * d
            if s >= T:
                continue                        # whole tap out of range -> 0
            mask = (t_row >= s).astype(jnp.float32)       # lazy (1, T) mask
            zs = pltpu.roll(z, shift=s, axis=1) * mask    # XLU roll + VPU mul
            acc = acc + w[:, k:k + 1] * zs
        return acc

    def prelu(z, a):
        return jnp.where(z >= 0, z, a * z)

    for l in range(num_levels):                 # static Python loop (unrolled)
        d = dilation_c ** l
        lvl = pack_ref[l]                       # (R, K+2)
        w = lvl[:, :K]                          # depthwise weights
        b = lvl[:, K:K + 1]                     # bias
        a = lvl[:, K + 1:K + 2]                 # PReLU slope
        conv = causal_depthwise_conv(h, w, b, d)
        if l == 0:                              # FirstBlock (attention gate is
            h = prelu(conv, a)                  #   pre-folded into w, wrapper)
        elif l == num_levels - 1:               # LastBlock: residual; Linear
            h = conv + h                        #   is folded into S (wrapper)
        else:                                   # TemporalBlock (residual)
            h = prelu(conv + h, a)

    # Fused (LastBlock Linear -> pointwise Conv1d) + batch un-fold as ONE
    # block-diagonal matmul S (nb, nb*C) @ h -> dense (nb, T_pad) output tile.
    # s_ref dtype selects the MXU path (bf16 default: ~3x fewer passes).
    y = jnp.dot(s_ref[...], h.astype(s_ref.dtype),
                preferred_element_type=jnp.float32)
    out_ref[...] = y + effb_ref[0, 0]           # scalar fused bias from SMEM


def _auto_nb(N, C, min_blocks):
    """Batch-fold factor: R = nb*C near 128 (v5e MXU width), nb multiple of 8
    when more than one grid block is used; tiny N keeps a single full block."""
    cap = max(8, (128 // max(C, 1)) // 8 * 8)
    if min_blocks > 1 and N >= 16:
        # v7x megacore: make sure the 'parallel' grid axis has >= min_blocks
        # steps so both TensorCores get work (keep >= 8 rows per output block).
        per = (-(-N // min_blocks) + 7) // 8 * 8
        cap = min(cap, max(8, per))
    return N if N <= cap else cap


def addstcn_forward(x, params, *, num_levels, kernel_size, dilation_c,
                    nb=None, min_blocks=1, mix_dtype=jnp.bfloat16):
    N, C, T = x.shape
    L, K = num_levels, kernel_size
    f32 = jnp.float32

    if nb is None:
        nb = _auto_nb(N, C, min_blocks)
    n_blocks = -(-N // nb)
    if n_blocks > 1 and nb % 8 != 0:
        raise ValueError("nb must be a multiple of 8 when >1 grid block is used")
    n_pad = n_blocks * nb
    t_pad = ((T + 127) // 128) * 128
    r = nb * C

    # Pad only when needed; keep the caller's dtype (bf16 x accepted — the
    # kernel casts to f32 on load; useful on HBM-bound v5e).
    if n_pad != N or t_pad != T:
        x = jnp.pad(x, ((0, n_pad - N), (0, 0), (0, t_pad - T)))
    x2 = x.reshape(n_pad * C, t_pad)            # fold batch onto sublanes

    # Fold the attention gate into the level-0 depthwise weights (level 0 is
    # linear in its input and depthwise, so the per-channel gate commutes).
    gate = _activ(params["att"].astype(f32))                 # (C, 1)
    conv_w = params["conv_w"].astype(f32)
    conv_w = conv_w.at[0].multiply(gate)

    # PReLU slopes: FirstBlock + TemporalBlocks carry one each (LastBlock none).
    alpha = params["alpha"].astype(f32)
    n_prelu = 1 if L == 1 else L - 1
    if alpha.shape[0] < n_prelu:
        raise ValueError(
            f"params['alpha'] must provide {n_prelu} per-channel PReLU slopes "
            f"(got {alpha.shape[0]}); for num_levels==1 the FirstBlock slope "
            f"must be alpha[0]")
    alpha_full = jnp.zeros((L, C, 1), f32).at[:n_prelu].set(alpha[:n_prelu])

    # Pack per-level per-channel params: [conv_w (K) | conv_b (1) | alpha (1)].
    pack = jnp.concatenate([conv_w, params["conv_b"].astype(f32), alpha_full],
                           axis=-1)                           # (L, C, K+2)
    pack = jnp.tile(pack, (1, nb, 1))                         # (L, nb*C, K+2)

    # Fuse LastBlock Linear with the pointwise conv (tiny O(C^2) wrapper work).
    if L >= 2:
        eff_w = params["pw_w"].astype(f32) @ params["lin_w"].astype(f32)
        eff_b = (params["pw_w"].astype(f32) @ params["lin_b"].astype(f32)
                 + params["pw_b"].astype(f32))
    else:
        eff_w = params["pw_w"].astype(f32)
        eff_b = params["pw_b"].astype(f32)
    s_mat = jnp.kron(jnp.eye(nb, dtype=f32), eff_w).astype(mix_dtype)  # (nb, r)
    eff_b = eff_b.reshape(1, 1).astype(f32)                   # scalar -> SMEM

    # VMEM sizing: double-buffered x/out tiles + resident params + in-kernel
    # f32 temporaries; raised well above 32 MiB where the chip allows it
    # (v5e/v6e have 128 MiB physical), clamped for v7x's 64 MiB per-TC budget.
    x_tile = r * t_pad * x.dtype.itemsize
    out_tile = nb * t_pad * 4
    temps = 6 * r * t_pad * 4
    need = 2 * x_tile + 2 * out_tile + temps + pack.size * 4 \
        + s_mat.size * s_mat.dtype.itemsize + (1 << 20)
    try:
        phys = pltpu.get_tpu_info().vmem_capacity_bytes
    except Exception:
        phys = 64 * 1024 * 1024
    vmem_limit = int(min(max(need, 32 << 20), 100 << 20, int(phys * 0.85)))

    cost = pl.CostEstimate(
        flops=int(n_pad * C * t_pad * (L * (2 * K + 4) + 2)),
        transcendentals=0,
        bytes_accessed=int(x2.size * x2.dtype.itemsize + n_pad * t_pad * 4
                           + pack.size * 4 + s_mat.size * s_mat.dtype.itemsize),
    )

    kernel = functools.partial(_addstcn_kernel, num_levels=L,
                               kernel_size=K, dilation_c=dilation_c)

    # TODO(synk): on v5e, if profiling shows exposed x DMA, add
    # pipeline_mode=pl.Buffered(3) to the x BlockSpec (default depth 2 kept to
    # spare v7x VMEM).
    y = pl.pallas_call(
        kernel,
        out_shape=jax.ShapeDtypeStruct((n_pad, t_pad), f32),
        grid_spec=pltpu.PrefetchScalarGridSpec(
            num_scalar_prefetch=0,
            grid=(n_blocks,),
            in_specs=[
                pl.BlockSpec((r, t_pad), lambda i: (i, 0)),          # x tile
                pl.BlockSpec(pack.shape, lambda i: (0, 0, 0)),       # params
                pl.BlockSpec(s_mat.shape, lambda i: (0, 0)),         # mix S
                pl.BlockSpec(memory_space=pltpu.MemorySpace.SMEM),   # eff_b
            ],
            out_specs=pl.BlockSpec((nb, t_pad), lambda i: (i, 0)),
        ),
        compiler_params=pltpu.CompilerParams(
            dimension_semantics=("parallel",),
            vmem_limit_bytes=vmem_limit),
        cost_estimate=cost,
    )(x2, pack, s_mat, eff_b)

    # module returns y1.transpose(1, 2): (N, 1, T) -> (N, T, 1)
    return y[:N, :T, None]


def addstcn_reference(x, params, *, num_levels, kernel_size, dilation_c):
    """Pure-JAX reference mirroring the torch forward."""
    scores = _activ(params["att"])                         # (C, 1)
    h = x.astype(jnp.float32) * scores[None]               # (N, C, T)
    N, C, T = x.shape
    K = kernel_size

    def dconv(z, w, b, d):
        pad = (K - 1) * d
        zp = jnp.pad(z, ((0, 0), (0, 0), (pad, 0)))
        out = jnp.zeros_like(z)
        for k in range(K):
            out = out + w[None, :, k:k + 1] * zp[:, :, k * d:k * d + T]
        return out + b[None]

    def prelu(z, a):
        return jnp.where(z >= 0, z, a[None] * z)

    for l in range(num_levels):
        d = dilation_c ** l
        w, b = params["conv_w"][l], params["conv_b"][l]
        if l == 0:
            h = prelu(dconv(h, w, b, d), params["alpha"][l])
        elif l == num_levels - 1:
            z = dconv(h, w, b, d) + h
            h = jnp.einsum("ij,njt->nit", params["lin_w"], z) + params["lin_b"][None]
        else:
            h = prelu(dconv(h, w, b, d) + h, params["alpha"][l])

    y = jnp.einsum("oc,nct->not", params["pw_w"], h) + params["pw_b"][None]
    return jnp.transpose(y, (0, 2, 1))


if __name__ == "__main__":
    # input_size=4 channels, seq length T=16, batch=2
    N, C, T = 2, 4, 16
    num_levels, kernel_size, dilation_c = 3, 2, 2

    key = jax.random.PRNGKey(0)
    ks = jax.random.split(key, 8)
    x = jax.random.normal(ks[0], (N, C, T), jnp.float32)

    params = dict(
        # nn.Parameter(torch.ones(input_size, 1) * 3.0)
        att=jnp.full((C, 1), 3.0, jnp.float32),
        # depthwise conv weights (C,1,K) squeezed -> (L, C, K)
        conv_w=0.1 * jax.random.normal(ks[1], (num_levels, C, kernel_size), jnp.float32),
        conv_b=0.1 * jax.random.normal(ks[2], (num_levels, C, 1), jnp.float32),
        # PReLU per-channel slope, torch default init 0.25 (blocks 0 .. L-2)
        alpha=jnp.full((num_levels - 1, C, 1), 0.25, jnp.float32),
        # LastBlock Linear(C, C)
        lin_w=0.01 * jax.random.normal(ks[3], (C, C), jnp.float32),
        lin_b=0.01 * jax.random.normal(ks[4], (C, 1), jnp.float32),
        # pointwise Conv1d(C, 1, 1)
        pw_w=0.1 * jax.random.normal(ks[5], (1, C), jnp.float32),
        pw_b=0.1 * jax.random.normal(ks[6], (1, 1), jnp.float32),
    )

    ref = addstcn_reference(x, params, num_levels=num_levels,
                            kernel_size=kernel_size, dilation_c=dilation_c)

    # Default path (bf16 channel-mix matmul) -> bf16-level tolerance.
    out = addstcn_forward(x, params, num_levels=num_levels,
                          kernel_size=kernel_size, dilation_c=dilation_c)
    jax.block_until_ready(out)
    assert out.shape == (N, T, 1), out.shape
    assert jnp.allclose(out, ref, atol=2e-3, rtol=2e-2), \
        float(jnp.max(jnp.abs(out - ref)))

    # Exact f32 mix path matches the f32 reference tightly.
    out32 = addstcn_forward(x, params, num_levels=num_levels,
                            kernel_size=kernel_size, dilation_c=dilation_c,
                            mix_dtype=jnp.float32)
    jax.block_until_ready(out32)
    assert jnp.allclose(out32, ref, atol=1e-5, rtol=1e-5), \
        float(jnp.max(jnp.abs(out32 - ref)))

    print("KERNEL_OK")
</pallas_src>

<mosaic_0001>
module attributes {stable_mosaic.version = 11 : i64} {
  func.func @_addstcn_kernel(%arg0: i32, %arg1: memref<8x128xf32, #tpu.memory_space<vmem>>, %arg2: memref<3x8x4xf32, #tpu.memory_space<vmem>>, %arg3: memref<2x8xbf16, #tpu.memory_space<vmem>>, %arg4: memref<1x1xf32, #tpu.memory_space<smem>>, %arg5: memref<2x128xf32, #tpu.memory_space<vmem>>) attributes {dimension_semantics = [#tpu.dimension_semantics<parallel>], iteration_bounds = array<i64: 1>, scalar_prefetch = 0 : i64, scratch_operands = 0 : i64, tpu.core_type = #tpu.core_type<tc>, window_params = [{transform_indices = @transform_0, window_bounds = array<i64: 8, 128>}, {pipeline_mode = #tpu.pipeline_mode<synchronous>, transform_indices = @transform_1, window_bounds = array<i64: 3, 8, 4>}, {pipeline_mode = #tpu.pipeline_mode<synchronous>, transform_indices = @transform_2, window_bounds = array<i64: 2, 8>}, {transform_indices = @transform_3, window_bounds = array<i64: 1, 1>}, {transform_indices = @transform_4, window_bounds = array<i64: 2, 128>}]} {
    %c0 = arith.constant 0 : index
    %c0_0 = arith.constant 0 : index
    %0 = vector.load %arg1[%c0, %c0_0] : memref<8x128xf32, #tpu.memory_space<vmem>>, vector<8x128xf32>
    %1 = tpu.iota {dimensions = array<i32: 1>} : vector<1x128xi32>
    %c0_1 = arith.constant 0 : index
    %c0_2 = arith.constant 0 : index
    %c0_3 = arith.constant 0 : index
    %2 = vector.load %arg2[%c0_1, %c0_2, %c0_3] : memref<3x8x4xf32, #tpu.memory_space<vmem>>, vector<1x8x4xf32>
    %3 = vector.shape_cast %2 : vector<1x8x4xf32> to vector<8x4xf32>
    %4 = vector.extract_strided_slice %3 {offsets = [0, 0], sizes = [8, 2], strides = [1, 1]} : vector<8x4xf32> to vector<8x2xf32>
    %5 = vector.extract_strided_slice %3 {offsets = [0, 2], sizes = [8, 1], strides = [1, 1]} : vector<8x4xf32> to vector<8x1xf32>
    %6 = vector.extract_strided_slice %3 {offsets = [0, 3], sizes = [8, 1], strides = [1, 1]} : vector<8x4xf32> to vector<8x1xf32>
    %7 = vector.extract_strided_slice %4 {offsets = [0, 1], sizes = [8, 1], strides = [1, 1]} : vector<8x2xf32> to vector<8x1xf32>
    %8 = vector.broadcast %7 : vector<8x1xf32> to vector<8x128xf32>
    %9 = arith.mulf %8, %0 : vector<8x128xf32>
    %10 = vector.broadcast %5 : vector<8x1xf32> to vector<8x128xf32>
    %11 = arith.addf %10, %9 : vector<8x128xf32>
    %c1_i32 = arith.constant 1 : i32
    %12 = vector.broadcast %c1_i32 : i32 to vector<1x128xi32>
    %13 = arith.cmpi sge, %1, %12 : vector<1x128xi32>
    %14 = arith.extui %13 : vector<1x128xi1> to vector<1x128xi32>
    %15 = arith.sitofp %14 : vector<1x128xi32> to vector<1x128xf32>
    %c1_i32_4 = arith.constant 1 : i32
    %16 = tpu.dynamic_rotate %0 by %c1_i32_4 dim 1 : vector<8x128xf32>, i32 -> vector<8x128xf32>
    %17 = vector.broadcast %15 : vector<1x128xf32> to vector<8x128xf32>
    %18 = arith.mulf %16, %17 : vector<8x128xf32>
    %19 = vector.extract_strided_slice %4 {offsets = [0, 0], sizes = [8, 1], strides = [1, 1]} : vector<8x2xf32> to vector<8x1xf32>
    %20 = vector.broadcast %19 : vector<8x1xf32> to vector<8x128xf32>
    %21 = arith.mulf %20, %18 : vector<8x128xf32>
    %22 = arith.addf %11, %21 : vector<8x128xf32>
    %cst = arith.constant 0.000000e+00 : f32
    %23 = vector.broadcast %cst : f32 to vector<8x128xf32>
    %24 = arith.cmpf oge, %22, %23 : vector<8x128xf32>
    %25 = vector.broadcast %6 : vector<8x1xf32> to vector<8x128xf32>
    %26 = arith.mulf %25, %22 : vector<8x128xf32>
    %27 = arith.select %24, %22, %26 : vector<8x128xi1>, vector<8x128xf32>
    %c1 = arith.constant 1 : index
    %c0_5 = arith.constant 0 : index
    %c0_6 = arith.constant 0 : index
    %28 = vector.load %arg2[%c1, %c0_5, %c0_6] : memref<3x8x4xf32, #tpu.memory_space<vmem>>, vector<1x8x4xf32>
    %29 = vector.shape_cast %28 : vector<1x8x4xf32> to vector<8x4xf32>
    %30 = vector.extract_strided_slice %29 {offsets = [0, 0], sizes = [8, 2], strides = [1, 1]} : vector<8x4xf32> to vector<8x2xf32>
    %31 = vector.extract_strided_slice %29 {offsets = [0, 2], sizes = [8, 1], strides = [1, 1]} : vector<8x4xf32> to vector<8x1xf32>
    %32 = vector.extract_strided_slice %29 {offsets = [0, 3], sizes = [8, 1], strides = [1, 1]} : vector<8x4xf32> to vector<8x1xf32>
    %33 = vector.extract_strided_slice %30 {offsets = [0, 1], sizes = [8, 1], strides = [1, 1]} : vector<8x2xf32> to vector<8x1xf32>
    %34 = vector.broadcast %33 : vector<8x1xf32> to vector<8x128xf32>
    %35 = arith.mulf %34, %27 : vector<8x128xf32>
    %36 = vector.broadcast %31 : vector<8x1xf32> to vector<8x128xf32>
    %37 = arith.addf %36, %35 : vector<8x128xf32>
    %c2_i32 = arith.constant 2 : i32
    %38 = vector.broadcast %c2_i32 : i32 to vector<1x128xi32>
    %39 = arith.cmpi sge, %1, %38 : vector<1x128xi32>
    %40 = arith.extui %39 : vector<1x128xi1> to vector<1x128xi32>
    %41 = arith.sitofp %40 : vector<1x128xi32> to vector<1x128xf32>
    %c2_i32_7 = arith.constant 2 : i32
    %42 = tpu.dynamic_rotate %27 by %c2_i32_7 dim 1 : vector<8x128xf32>, i32 -> vector<8x128xf32>
    %43 = vector.broadcast %41 : vector<1x128xf32> to vector<8x128xf32>
    %44 = arith.mulf %42, %43 : vector<8x128xf32>
    %45 = vector.extract_strided_slice %30 {offsets = [0, 0], sizes = [8, 1], strides = [1, 1]} : vector<8x2xf32> to vector<8x1xf32>
    %46 = vector.broadcast %45 : vector<8x1xf32> to vector<8x128xf32>
    %47 = arith.mulf %46, %44 : vector<8x128xf32>
    %48 = arith.addf %37, %47 : vector<8x128xf32>
    %49 = arith.addf %48, %27 : vector<8x128xf32>
    %cst_8 = arith.constant 0.000000e+00 : f32
    %50 = vector.broadcast %cst_8 : f32 to vector<8x128xf32>
    %51 = arith.cmpf oge, %49, %50 : vector<8x128xf32>
    %52 = vector.broadcast %32 : vector<8x1xf32> to vector<8x128xf32>
    %53 = arith.mulf %52, %49 : vector<8x128xf32>
    %54 = arith.select %51, %49, %53 : vector<8x128xi1>, vector<8x128xf32>
    %c2 = arith.constant 2 : index
    %c0_9 = arith.constant 0 : index
    %c0_10 = arith.constant 0 : index
    %55 = vector.load %arg2[%c2, %c0_9, %c0_10] : memref<3x8x4xf32, #tpu.memory_space<vmem>>, vector<1x8x4xf32>
    %56 = vector.shape_cast %55 : vector<1x8x4xf32> to vector<8x4xf32>
    %57 = vector.extract_strided_slice %56 {offsets = [0, 0], sizes = [8, 2], strides = [1, 1]} : vector<8x4xf32> to vector<8x2xf32>
    %58 = vector.extract_strided_slice %56 {offsets = [0, 2], sizes = [8, 1], strides = [1, 1]} : vector<8x4xf32> to vector<8x1xf32>
    %59 = vector.extract_strided_slice %57 {offsets = [0, 1], sizes = [8, 1], strides = [1, 1]} : vector<8x2xf32> to vector<8x1xf32>
    %60 = vector.broadcast %59 : vector<8x1xf32> to vector<8x128xf32>
    %61 = arith.mulf %60, %54 : vector<8x128xf32>
    %62 = vector.broadcast %58 : vector<8x1xf32> to vector<8x128xf32>
    %63 = arith.addf %62, %61 : vector<8x128xf32>
    %c4_i32 = arith.constant 4 : i32
    %64 = vector.broadcast %c4_i32 : i32 to vector<1x128xi32>
    %65 = arith.cmpi sge, %1, %64 : vector<1x128xi32>
    %66 = arith.extui %65 : vector<1x128xi1> to vector<1x128xi32>
    %67 = arith.sitofp %66 : vector<1x128xi32> to vector<1x128xf32>
    %c4_i32_11 = arith.constant 4 : i32
    %68 = tpu.dynamic_rotate %54 by %c4_i32_11 dim 1 : vector<8x128xf32>, i32 -> vector<8x128xf32>
    %69 = vector.broadcast %67 : vector<1x128xf32> to vector<8x128xf32>
    %70 = arith.mulf %68, %69 : vector<8x128xf32>
    %71 = vector.extract_strided_slice %57 {offsets = [0, 0], sizes = [8, 1], strides = [1, 1]} : vector<8x2xf32> to vector<8x1xf32>
    %72 = vector.broadcast %71 : vector<8x1xf32> to vector<8x128xf32>
    %73 = arith.mulf %72, %70 : vector<8x128xf32>
    %74 = arith.addf %63, %73 : vector<8x128xf32>
    %75 = arith.addf %74, %54 : vector<8x128xf32>
    %c0_12 = arith.constant 0 : index
    %c0_13 = arith.constant 0 : index
    %76 = vector.load %arg3[%c0_12, %c0_13] : memref<2x8xbf16, #tpu.memory_space<vmem>>, vector<2x8xbf16>
    %77 = arith.truncf %75 : vector<8x128xf32> to vector<8x128xbf16>
    %cst_14 = arith.constant dense<0.000000e+00> : vector<2x128xf32>
    %78 = tpu.matmul %76, %77, %cst_14 {dimension_numbers = #tpu.dot_dimension_numbers<[1], [0], [0], [1], [0, 0, 1, 1], [], []>} : vector<2x8xbf16>, vector<8x128xbf16>, vector<2x128xf32> -> vector<2x128xf32>
    %c0_15 = arith.constant 0 : index
    %c0_16 = arith.constant 0 : index
    %79 = memref.load %arg4[%c0_15, %c0_16] : memref<1x1xf32, #tpu.memory_space<smem>>
    %80 = vector.broadcast %79 : f32 to vector<2x128xf32>
    %81 = arith.addf %78, %80 : vector<2x128xf32>
    %c0_17 = arith.constant 0 : index
    %c0_18 = arith.constant 0 : index
    %82 = vector.load %arg5[%c0_17, %c0_18] : memref<2x128xf32, #tpu.memory_space<vmem>>, vector<2x128xf32>
    tpu.vector_store %arg5[%c0_17, %c0_18], %81 {strides = array<i32>} : memref<2x128xf32, #tpu.memory_space<vmem>>, vector<2x128xf32>,
    return
  }
  func.func @transform_0(%arg0: i32) -> (i32, i32) {
    %c0_i32 = arith.constant 0 : i32
    %c0_i32_0 = arith.constant 0 : i32
    return %arg0, %c0_i32 : i32, i32
  }
  func.func @transform_1(%arg0: i32) -> (i32, i32, i32) {
    %c0_i32 = arith.constant 0 : i32
    %c0_i32_0 = arith.constant 0 : i32
    %c0_i32_1 = arith.constant 0 : i32
    %c0_i32_2 = arith.constant 0 : i32
    return %c0_i32, %c0_i32_0, %c0_i32_1 : i32, i32, i32
  }
  func.func @transform_2(%arg0: i32) -> (i32, i32) {
    %c0_i32 = arith.constant 0 : i32
    %c0_i32_0 = arith.constant 0 : i32
    %c0_i32_1 = arith.constant 0 : i32
    return %c0_i32, %c0_i32_0 : i32, i32
  }
  func.func @transform_3(%arg0: i32) -> (i32, i32) {
    %c0_i32 = arith.constant 0 : i32
    %c0_i32_0 = arith.constant 0 : i32
    %c0_i32_1 = arith.constant 0 : i32
    return %c0_i32, %c0_i32_0 : i32, i32
  }
  func.func @transform_4(%arg0: i32) -> (i32, i32) {
    %c0_i32 = arith.constant 0 : i32
    %c0_i32_0 = arith.constant 0 : i32
    return %arg0, %c0_i32 : i32, i32
  }
}

</mosaic_0001>

<llo_original>
// kernel: tpu_custom_call.1
$region0: #{tpu_custom_call.1}
  #allocation0 [shape = 'u32[]', space=smem, size = 0x4, offset = 0x4, fixed_abs, tag = 'smem constant byte address 0x4 - core index']
  #allocation1 [shape = 'u32[144,128]{1,0:T(1,128)}', space=vmem, size = 0x12000, scoped, tag = 'internal scratch']
  #allocation2 [shape = 'f32[1,1]{1,0:T(1,128)S(6)}', space=smem, size = 0x200, scoped, tag = 'scoped memory for tpu_custom_call.1']
  %s0 = inlined_call_operand.vmem [shape: f32[8,128], index: 0, kind: input, shape index: {}]
  %s1 = inlined_call_operand.vmem [shape: f32[3,8,4], index: 1, kind: input, shape index: {}]
  %s2 = inlined_call_operand.vmem [shape: bf16[2,8], index: 2, kind: input, shape index: {}]
  %s3 = inlined_call_operand.<no memory space> [shape: f32[1,1], index: 3, kind: input, shape index: {}]
  %s4 = inlined_call_operand.hbm [shape: f32[2,128], index: 4, kind: output, shape index: {}]
  %s5 = sld [smem:[#allocation0]]
  $region26: #{tpu_custom_call.1} parent=0
    _
  %s7 = ssub.s32 1, %s5
  %s8 = scalar_select 0, %s7, %s5
  %9 = sst [smem:[#allocation2]] %s3
  $region1: #{tpu_custom_call.1} parent=0
    #allocation3 [shape = 'u8[1024]{0}', space=vmem, size = 0x400, scoped, tag = 'output window, operand 0, single buffered']
    #allocation4 [shape = 's32[1]{0}', space=sflag, size = 0x4, scoped, tag = 'scoped memory for tpu_custom_call.1']
    %10 = vsyncpa [#allocation4], 0
    // Predicated region
    $region2: #{tpu_custom_call.1} parent=1 // pred_check
      _
    $region3: #{tpu_custom_call.1} parent=1 // pred_check_branch
      %12 = sbr.rel (0) target = $region5
    $region4: #{tpu_custom_call.1} parent=1 // pred_region
      _
    $region5: #{tpu_custom_call.1} parent=1 // pred_fallthru
      _
    // Predicated region
    $region6: #{tpu_custom_call.1} parent=1 // pred_check
      _
    $region7: #{tpu_custom_call.1} parent=1 // pred_check_branch
      %14 = sbr.rel (0) target = $region9
    $region8: #{tpu_custom_call.1} parent=1 // pred_region
      _
    $region9: #{tpu_custom_call.1} parent=1 // pred_fallthru
      _
    // Predicated region
    $region10: #{tpu_custom_call.1} parent=1 // pred_check
      _
    $region11: #{tpu_custom_call.1} parent=1 // pred_check_branch
      %16 = sbr.rel (0) target = $region13
    $region12: #{tpu_custom_call.1} parent=1 // pred_region
      _
    $region13: #{tpu_custom_call.1} parent=1 // pred_fallthru
      _
    // Predicated region
    $region14: #{tpu_custom_call.1} parent=1 // pred_check
      _
    $region15: #{tpu_custom_call.1} parent=1 // pred_check_branch
      %18 = sbr.rel (0) target = $region17
    $region16: #{tpu_custom_call.1} parent=1 // pred_region
      _
    $region17: #{tpu_custom_call.1} parent=1 // pred_fallthru
      _
    %v20 = vld [vmem:[%s0] sm:$0xff]
    %v21 = vlaneseq
    %v22 = vand.u32 %v21, 127
    %v23 = vld [vmem:[%s1] sm:$0xff]
    %25 = vset.pattern.permute.xlu0 1
    %26 = vperm.xlu0 %25, %v23
    %v27 = vpop.permute.xlu0 %26
    %v29 = vmul.f32 %v27, %v20
    %30 = vset.pattern.permute.xlu0 2
    %31 = vperm.xlu0 %30, %v23
    %v32 = vpop.permute.xlu0 %31
    %v34 = vadd.f32 %v32, %v29
    %vm35 = vcmp.ge.s32.totalorder %v22, 1
    %v36 = vsel %vm35, 1, 0
    %v37 = vcvt.s32.f32 %v36
    %38 = vrot.lane.b32.xlu0 %v20, 1
    %v39 = vpop.permute.xlu0 %38
    %v40 = vmul.f32 %v39, %v37
    %41 = vset.pattern.permute.xlu0 0
    %42 = vperm.xlu0 %41, %v23
    %v43 = vpop.permute.xlu0 %42
    %v45 = vmul.f32 %v43, %v40
    %v46 = vadd.f32 %v34, %v45
    %vm47 = vcmp.ge.f32.partialorder %v46, 0.0
    %48 = vset.pattern.permute.xlu0 3
    %49 = vperm.xlu0 %48, %v23
    %v50 = vpop.permute.xlu0 %49
    %v52 = vmul.f32 %v50, %v46
    %v53 = vsel %vm47, %v46, %v52
    %s54 = scalar_lea.vmem %s1, 8
    %v55 = vld [vmem:[%s54] sm:$0xff]
    %57 = vset.pattern.permute.xlu0 1
    %58 = vperm.xlu0 %57, %v55
    %v59 = vpop.permute.xlu0 %58
    %v61 = vmul.f32 %v59, %v53
    %62 = vset.pattern.permute.xlu0 2
    %63 = vperm.xlu0 %62, %v55
    %v64 = vpop.permute.xlu0 %63
    %v66 = vadd.f32 %v64, %v61
    %vm67 = vcmp.ge.s32.totalorder %v22, 2
    %v68 = vsel %vm67, 1, 0
    %v69 = vcvt.s32.f32 %v68
    %70 = vrot.lane.b32.xlu0 %v53, 2
    %v71 = vpop.permute.xlu0 %70
    %v72 = vmul.f32 %v71, %v69
    %73 = vset.pattern.permute.xlu0 0
    %74 = vperm.xlu0 %73, %v55
    %v75 = vpop.permute.xlu0 %74
    %v77 = vmul.f32 %v75, %v72
    %v78 = vadd.f32 %v66, %v77
    %v79 = vadd.f32 %v78, %v53
    %vm80 = vcmp.ge.f32.partialorder %v79, 0.0
    %81 = vset.pattern.permute.xlu0 3
    %82 = vperm.xlu0 %81, %v55
    %v83 = vpop.permute.xlu0 %82
    %v85 = vmul.f32 %v83, %v79
    %v86 = vsel %vm80, %v79, %v85
    %s87 = scalar_lea.vmem %s1, 16
    %v88 = vld [vmem:[%s87] sm:$0xff]
    %90 = vset.pattern.permute.xlu0 1
    %91 = vperm.xlu0 %90, %v88
    %v92 = vpop.permute.xlu0 %91
    %v94 = vmul.f32 %v92, %v86
    %95 = vset.pattern.permute.xlu0 2
    %96 = vperm.xlu0 %95, %v88
    %v97 = vpop.permute.xlu0 %96
    %v99 = vadd.f32 %v97, %v94
    %vm100 = vcmp.ge.s32.totalorder %v22, 4
    %v101 = vsel %vm100, 1, 0
    %v102 = vcvt.s32.f32 %v101
    %103 = vrot.lane.b32.xlu0 %v86, 4
    %v104 = vpop.permute.xlu0 %103
    %v105 = vmul.f32 %v104, %v102
    %106 = vset.pattern.permute.xlu0 0
    %107 = vperm.xlu0 %106, %v88
    %v108 = vpop.permute.xlu0 %107
    %v110 = vmul.f32 %v108, %v105
    %v111 = vadd.f32 %v99, %v110
    %v112 = vadd.f32 %v111, %v86
    %v113 = vld [vmem:[%s2] sm:$0x1]
    %v114 = vpack.c.bf16 %v112, %v112
    %s115 = sld [smem:[#allocation2]]
    %v116 = vstv %s115
    %vm117 = vcmask 64512
    %v119 = vsel %vm117, %v113, 0
    %vm121 = vcmask 1043456
    %v123 = vsel %vm121, %v114, 0
    %125 = vmatprep.subr.bf16.mxu0 0
    %126 = vmatpush1.bf16.msra.mxu0 %v123
    %127 = vmatprep.subr.bf16.mxu0 0
    %128 = vmatpush1.bf16.msra.mxu0 0
    %129 = vmatprep.subr.bf16.mxu0 0
    %130 = vmatpush1.bf16.msra.mxu0 0
    %131 = vmatprep.subr.bf16.mxu0 0
    %132 = vmatpush1.bf16.msra.mxu0 0
    %133 = vmatprep.subr.bf16.mxu0 0
    %134 = vmatpush1.bf16.msra.mxu0 0
    %135 = vmatprep.subr.bf16.mxu0 0
    %136 = vmatpush1.bf16.msra.mxu0 0
    %137 = vmatprep.subr.bf16.mxu0 0
    %138 = vmatpush1.bf16.msra.mxu0 0
    %139 = vmatprep.subr.bf16.mxu0 0
    %140 = vmatpush1.bf16.msra.mxu0 0
    %141 = vmatprep.subr.bf16.mxu0 0
    %142 = vmatpush1.bf16.msra.mxu0 0
    %143 = vmatprep.subr.bf16.mxu0 0
    %144 = vmatpush1.bf16.msra.mxu0 0
    %145 = vmatprep.subr.bf16.mxu0 0
    %146 = vmatpush1.bf16.msra.mxu0 0
    %147 = vmatprep.subr.bf16.mxu0 0
    %148 = vmatpush1.bf16.msra.mxu0 0
    %149 = vmatprep.subr.bf16.mxu0 0
    %150 = vmatpush1.bf16.msra.mxu0 0
    %151 = vmatprep.subr.bf16.mxu0 0
    %152 = vmatpush1.bf16.msra.mxu0 0
    %153 = vmatprep.subr.bf16.mxu0 0
    %154 = vmatpush1.bf16.msra.mxu0 0
    %155 = vmatprep.subr.bf16.mxu0 0
    %156 = vmatpush1.bf16.msra.mxu0 0
    %157 = vmatprep.mubr.bf16.mxu0 0
    %158 = vmatmul.mubr.bf16.gmra.mrb[0].mxu0 %v119
    %v159 = vpop.f32.mrb[0].mxu0
    %v160 = vadd.f32 %v116, %v159
    %v161 = vpop.f32.mrb[0].mxu0
    %v162 = vpop.f32.mrb[0].mxu0
    %v163 = vpop.f32.mrb[0].mxu0
    %164 = vdwg.mxu0
    %165 = vst [vmem:[#allocation3] sm:$0x3] %v160
    // Predicated region
    $region18: #{tpu_custom_call.1} parent=1 // pred_check
      _
    $region19: #{tpu_custom_call.1} parent=1 // pred_check_branch
      %167 = sbr.rel (0) target = $region21
    $region20: #{tpu_custom_call.1} parent=1 // pred_region
      %s169 = ssub.s32 32, 32
      %170 = vsyncadd [#allocation4], %s169
      %s172 = sshll.u32 [#allocation3], 4
      %s173 = int_to_ptr.vmem [resolvable:$true] %s172
      %175 = dma.vmem_to_hbm [thread:$0]  %s173, 32, %s4, [#allocation4]
    $region21: #{tpu_custom_call.1} parent=1 // pred_fallthru
      _
    // Predicated region
    $region22: #{tpu_custom_call.1} parent=1 // pred_check
      _
    $region23: #{tpu_custom_call.1} parent=1 // pred_check_branch
      %177 = sbr.rel (0) target = $region25
    $region24: #{tpu_custom_call.1} parent=1 // pred_region
      %178 = dma.done [#allocation4], 32
    $region25: #{tpu_custom_call.1} parent=1 // pred_fallthru
      _
    %179 = vsyncpa [#allocation4], 1

</llo_original>
